<compile_context>
chip_gen: v6e
topology: v6e:2x2x1
jax: 0.10.0
libtpu: 0.0.40
codegen_flags: <defaults>
</compile_context>

<pallas_src>
import jax
import jax.numpy as jnp
from jax.experimental import pallas as pl
from jax.experimental.pallas import tpu as pltpu

HIDDEN = 256  # hidden width of the forward_dynamics MLP


def _round_up(x, m):
    return ((x + m - 1) // m) * m


def _cdiv(a, b):
    return (a + b - 1) // b


def _pick_batch_tile(B, b_tile=1024, bt_cap=4096, align=256):
    """Batch-tile heuristic:
      - large enough to amortize ~0.35us per-grid-step overhead (target 1024),
      - multiple of 256 (MXU M alignment; also valid f32/bf16 sublane tilings),
      - sized from cdiv(B, n_steps) so batch padding stays < one tile,
      - >= 2 grid steps once there is enough work (feeds both v7x TensorCores),
      - capped at 4096 so the double-buffered x/out blocks plus f32
        intermediates stay well under the 32 MiB default scoped-VMEM limit."""
    n_steps = _cdiv(B, b_tile)
    if n_steps == 1 and B >= 2 * align:
        n_steps = 2
    bt = _round_up(_cdiv(B, n_steps), align)
    return min(bt, bt_cap)


# ---------------------------------------------------------------------------
# Kernels
# ---------------------------------------------------------------------------

def _fd_mlp(x_ref, act_ref, w1a_ref, w1b_ref, b1_ref, w2_ref, b2_ref):
    """Shared fused body: in-kernel one-hot + 2-layer MLP, f32 accumulation.

    x:   (bt, D)        f32   state embedding (cast to bf16 in-kernel)
    act: (bt, 1)        i32   action indices
    w1a: (D, 256)       bf16  first-layer weights for the state part
    w1b: (A_pad, 256)   bf16  first-layer weights for the one-hot part
    b1:  (1, 256)       f32
    w2:  (256, N)       bf16
    b2:  (1, N)         f32
    returns y: (bt, N)  f32
    """
    x = x_ref[...].astype(w1a_ref.dtype)
    h = jnp.dot(x, w1a_ref[...], preferred_element_type=jnp.float32)

    # Fused F.one_hot + concat: one_hot @ W1b added to the state-part matmul.
    bt, a_pad = x.shape[0], w1b_ref.shape[0]
    one_hot = (jax.lax.broadcasted_iota(jnp.int32, (bt, a_pad), 1)
               == act_ref[...]).astype(w1b_ref.dtype)
    h = h + jnp.dot(one_hot, w1b_ref[...], preferred_element_type=jnp.float32)

    h = jnp.maximum(h + b1_ref[...], 0.0)                       # f32 bias + ReLU (v5e-safe)
    y = jnp.dot(h.astype(w2_ref.dtype), w2_ref[...],
                preferred_element_type=jnp.float32) + b2_ref[...]
    return y


def _forward_kernel(x_ref, act_ref, w1a_ref, w1b_ref, b1_ref, w2_ref, b2_ref,
                    out_ref):
    y = _fd_mlp(x_ref, act_ref, w1a_ref, w1b_ref, b1_ref, w2_ref, b2_ref)
    out_ref[...] = y.astype(out_ref.dtype)


def _error_kernel(x_ref, act_ref, next_ref, w1a_ref, w1b_ref, b1_ref, w2_ref,
                  b2_ref, err_ref):
    # Fused consumer (RIDE intrinsic-reward path): per-row squared error only.
    y = _fd_mlp(x_ref, act_ref, w1a_ref, w1b_ref, b1_ref, w2_ref, b2_ref)
    d = y - next_ref[...].astype(jnp.float32)
    err_ref[...] = jnp.sum(d * d, axis=-1, keepdims=True).astype(err_ref.dtype)


# ---------------------------------------------------------------------------
# Parameters
# ---------------------------------------------------------------------------

def make_params(key, input_size=32, num_actions=7, compute_dtype=jnp.bfloat16):
    """Synthetic parameters matching the PyTorch init (orthogonal weights over
    the full fan-in, gain=sqrt(2) for the hidden layer, gain=1 for the head,
    zero biases).  All splitting / padding / casting is done here, once."""
    k1, k2 = jax.random.split(key)
    ortho = jax.nn.initializers.orthogonal
    relu_gain = 2.0 ** 0.5
    K = input_size + num_actions
    a_pad = _round_up(num_actions, 8)          # sublane-aligned one-hot width
    out_pad = _round_up(input_size, 128)       # lane-dense padded head width

    w1 = ortho(scale=relu_gain)(k1, (K, HIDDEN), jnp.float32)        # (D+A, 256)
    w2 = ortho(scale=1.0)(k2, (HIDDEN, input_size), jnp.float32)     # (256, D)

    w1a = w1[:input_size]                                            # (D, 256)
    w1b = jnp.zeros((a_pad, HIDDEN), jnp.float32).at[:num_actions].set(
        w1[input_size:])                                             # (A_pad, 256)
    w2_pad = jnp.zeros((HIDDEN, out_pad), jnp.float32).at[:, :input_size].set(w2)

    return {
        "input_size": input_size,
        "num_actions": num_actions,
        # kernel-side operands (bf16 weights, f32 biases)
        "w1a": w1a.astype(compute_dtype),
        "w1b": w1b.astype(compute_dtype),
        "b1": jnp.zeros((1, HIDDEN), jnp.float32),
        "w2": w2_pad.astype(compute_dtype),                  # lane-dense head
        "b2": jnp.zeros((1, out_pad), jnp.float32),
        "w2_d": w2.astype(compute_dtype),                    # un-padded head (fused-error)
        "b2_d": jnp.zeros((1, input_size), jnp.float32),
        # f32 copies kept only for the reference check in __main__
        "w1_f32": w1,
        "w2_f32": w2,
    }


# ---------------------------------------------------------------------------
# Wrappers
# ---------------------------------------------------------------------------

def _prep_batch(state_embedding, action, b_tile):
    B = state_embedding.shape[0]
    act = action.reshape(B, 1).astype(jnp.int32)
    bt = _pick_batch_tile(B, b_tile)
    Bp = _round_up(B, bt)
    x = state_embedding
    if Bp != B:
        x = jnp.pad(x, ((0, Bp - B), (0, 0)))
        act = jnp.pad(act, ((0, Bp - B), (0, 0)))
    return x, act, B, Bp, bt


def forward_dynamics_forward(state_embedding, action, params, *, b_tile=1024,
                             out_dtype=None):
    """state_embedding: (B, D) f32; action: (B,) or (B, 1) int.
    Returns the predicted next-state embedding (B, D) (same semantics as the
    PyTorch module).  Set out_dtype=jnp.bfloat16 to halve output writeback if
    the consumer tolerates it."""
    D = params["input_size"]
    a_pad = params["w1b"].shape[0]
    out_pad = params["w2"].shape[1]
    out_dtype = state_embedding.dtype if out_dtype is None else out_dtype

    x, act, B, Bp, bt = _prep_batch(state_embedding, action, b_tile)
    grid = (Bp // bt,)

    weight_bytes = sum(int(params[k].size) * params[k].dtype.itemsize
                       for k in ("w1a", "w1b", "b1", "w2", "b2"))
    cost = pl.CostEstimate(
        flops=2 * Bp * HIDDEN * (D + a_pad + out_pad),
        transcendentals=0,
        bytes_accessed=Bp * (D * 4 + 4 + out_pad * jnp.dtype(out_dtype).itemsize)
        + weight_bytes,
    )

    out = pl.pallas_call(
        _forward_kernel,
        out_shape=jax.ShapeDtypeStruct((Bp, out_pad), out_dtype),
        grid_spec=pltpu.PrefetchScalarGridSpec(
            num_scalar_prefetch=0,
            grid=grid,
            in_specs=[
                pl.BlockSpec((bt, D), lambda i: (i, 0)),            # state emb moves
                pl.BlockSpec((bt, 1), lambda i: (i, 0)),            # actions move
                pl.BlockSpec((D, HIDDEN), lambda i: (0, 0)),        # weights resident
                pl.BlockSpec((a_pad, HIDDEN), lambda i: (0, 0)),
                pl.BlockSpec((1, HIDDEN), lambda i: (0, 0)),
                pl.BlockSpec((HIDDEN, out_pad), lambda i: (0, 0)),
                pl.BlockSpec((1, out_pad), lambda i: (0, 0)),
            ],
            out_specs=pl.BlockSpec((bt, out_pad), lambda i: (i, 0)),
        ),
        compiler_params=pltpu.CompilerParams(
            dimension_semantics=("parallel",)),                     # megacore on v7x
        cost_estimate=cost,
    )(x, act, params["w1a"], params["w1b"], params["b1"],
      params["w2"], params["b2"])

    # Drop batch padding and the zero-padded head columns.
    return out[:B, :D]


def forward_dynamics_error(state_embedding, action, next_state_embedding,
                           params, *, b_tile=1024):
    """Fused consumer variant (RIDE intrinsic reward): returns the per-row
    squared prediction error ||pred - next||^2 of shape (B,), avoiding the
    (B, 128) f32 embedding writeback entirely."""
    D = params["input_size"]
    a_pad = params["w1b"].shape[0]

    x, act, B, Bp, bt = _prep_batch(state_embedding, action, b_tile)
    nxt = next_state_embedding
    if Bp != B:
        nxt = jnp.pad(nxt, ((0, Bp - B), (0, 0)))
    grid = (Bp // bt,)

    weight_bytes = sum(int(params[k].size) * params[k].dtype.itemsize
                       for k in ("w1a", "w1b", "b1", "w2_d", "b2_d"))
    cost = pl.CostEstimate(
        flops=2 * Bp * HIDDEN * (D + a_pad + D) + 3 * Bp * D,
        transcendentals=0,
        bytes_accessed=Bp * (2 * D * 4 + 4 + 4) + weight_bytes,
    )

    err = pl.pallas_call(
        _error_kernel,
        out_shape=jax.ShapeDtypeStruct((Bp, 1), jnp.float32),
        grid_spec=pltpu.PrefetchScalarGridSpec(
            num_scalar_prefetch=0,
            grid=grid,
            in_specs=[
                pl.BlockSpec((bt, D), lambda i: (i, 0)),
                pl.BlockSpec((bt, 1), lambda i: (i, 0)),
                pl.BlockSpec((bt, D), lambda i: (i, 0)),            # next-state emb
                pl.BlockSpec((D, HIDDEN), lambda i: (0, 0)),
                pl.BlockSpec((a_pad, HIDDEN), lambda i: (0, 0)),
                pl.BlockSpec((1, HIDDEN), lambda i: (0, 0)),
                pl.BlockSpec((HIDDEN, D), lambda i: (0, 0)),
                pl.BlockSpec((1, D), lambda i: (0, 0)),
            ],
            out_specs=pl.BlockSpec((bt, 1), lambda i: (i, 0)),
        ),
        compiler_params=pltpu.CompilerParams(
            dimension_semantics=("parallel",)),
        cost_estimate=cost,
    )(x, act, nxt, params["w1a"], params["w1b"], params["b1"],
      params["w2_d"], params["b2_d"])

    return err[:B, 0]


if __name__ == "__main__":
    input_size = 32
    num_actions = 7
    batch = 8

    key = jax.random.PRNGKey(0)
    kp, ks, ka, kn = jax.random.split(key, 4)
    params = make_params(kp, input_size=input_size, num_actions=num_actions)

    state_emb = jax.random.normal(ks, (batch, input_size), jnp.float32)
    action = jax.random.randint(ka, (batch, 1), 0, num_actions, dtype=jnp.int32)
    next_emb = jax.random.normal(kn, (batch, input_size), jnp.float32)

    out = forward_dynamics_forward(state_emb, action, params)
    out = jax.block_until_ready(out)

    # Pure-JAX f32 reference of the exact PyTorch forward semantics.
    one_hot = jax.nn.one_hot(action.reshape(batch), num_actions, dtype=jnp.float32)
    inputs = jnp.concatenate([state_emb, one_hot], axis=1)
    h_ref = jnp.maximum(inputs @ params["w1_f32"] + params["b1"][0], 0.0)
    ref = h_ref @ params["w2_f32"] + params["b2_d"][0]

    assert out.shape == (batch, input_size)
    # bf16 MXU operands with f32 accumulation vs. pure-f32 reference.
    assert jnp.allclose(out, ref, atol=5e-2, rtol=5e-2), \
        float(jnp.max(jnp.abs(out - ref)))

    # Fused-consumer variant: per-row squared prediction error.
    err = forward_dynamics_error(state_emb, action, next_emb, params)
    err = jax.block_until_ready(err)
    err_ref = jnp.sum((ref - next_emb) ** 2, axis=1)
    assert err.shape == (batch,)
    assert jnp.allclose(err, err_ref, rtol=1e-1, atol=1.0), \
        float(jnp.max(jnp.abs(err - err_ref)))

    print("KERNEL_OK")
</pallas_src>

<mosaic_0001>
module attributes {stable_mosaic.version = 11 : i64} {
  func.func @_forward_kernel(%arg0: i32, %arg1: memref<256x32xf32, #tpu.memory_space<vmem>>, %arg2: memref<256x1xi32, #tpu.memory_space<vmem>>, %arg3: memref<32x256xbf16, #tpu.memory_space<vmem>>, %arg4: memref<8x256xbf16, #tpu.memory_space<vmem>>, %arg5: memref<1x256xf32, #tpu.memory_space<vmem>>, %arg6: memref<256x128xbf16, #tpu.memory_space<vmem>>, %arg7: memref<1x128xf32, #tpu.memory_space<vmem>>, %arg8: memref<256x128xf32, #tpu.memory_space<vmem>>) attributes {dimension_semantics = [#tpu.dimension_semantics<parallel>], iteration_bounds = array<i64: 1>, scalar_prefetch = 0 : i64, scratch_operands = 0 : i64, tpu.core_type = #tpu.core_type<tc>, window_params = [{transform_indices = @transform_0, window_bounds = array<i64: 256, 32>}, {transform_indices = @transform_1, window_bounds = array<i64: 256, 1>}, {pipeline_mode = #tpu.pipeline_mode<synchronous>, transform_indices = @transform_2, window_bounds = array<i64: 32, 256>}, {pipeline_mode = #tpu.pipeline_mode<synchronous>, transform_indices = @transform_3, window_bounds = array<i64: 8, 256>}, {pipeline_mode = #tpu.pipeline_mode<synchronous>, transform_indices = @transform_4, window_bounds = array<i64: 1, 256>}, {pipeline_mode = #tpu.pipeline_mode<synchronous>, transform_indices = @transform_5, window_bounds = array<i64: 256, 128>}, {pipeline_mode = #tpu.pipeline_mode<synchronous>, transform_indices = @transform_6, window_bounds = array<i64: 1, 128>}, {transform_indices = @transform_7, window_bounds = array<i64: 256, 128>}]} {
    %c0 = arith.constant 0 : index
    %c0_0 = arith.constant 0 : index
    %0 = vector.load %arg1[%c0, %c0_0] : memref<256x32xf32, #tpu.memory_space<vmem>>, vector<256x32xf32>
    %1 = arith.truncf %0 : vector<256x32xf32> to vector<256x32xbf16>
    %c0_1 = arith.constant 0 : index
    %c0_2 = arith.constant 0 : index
    %2 = vector.load %arg3[%c0_1, %c0_2] : memref<32x256xbf16, #tpu.memory_space<vmem>>, vector<32x256xbf16>
    %cst = arith.constant dense<0.000000e+00> : vector<256x256xf32>
    %3 = tpu.matmul %1, %2, %cst {dimension_numbers = #tpu.dot_dimension_numbers<[1], [0], [0], [1], [0, 0, 1, 1], [], []>} : vector<256x32xbf16>, vector<32x256xbf16>, vector<256x256xf32> -> vector<256x256xf32>
    %4 = tpu.iota {dimensions = array<i32: 1>} : vector<256x8xi32>
    %c0_3 = arith.constant 0 : index
    %c0_4 = arith.constant 0 : index
    %5 = vector.load %arg2[%c0_3, %c0_4] : memref<256x1xi32, #tpu.memory_space<vmem>>, vector<256x1xi32>
    %6 = vector.broadcast %5 : vector<256x1xi32> to vector<256x8xi32>
    %7 = arith.cmpi eq, %4, %6 : vector<256x8xi32>
    %8 = arith.extui %7 : vector<256x8xi1> to vector<256x8xi32>
    %9 = arith.sitofp %8 : vector<256x8xi32> to vector<256x8xf32>
    %10 = arith.truncf %9 : vector<256x8xf32> to vector<256x8xbf16>
    %c0_5 = arith.constant 0 : index
    %c0_6 = arith.constant 0 : index
    %11 = vector.load %arg4[%c0_5, %c0_6] : memref<8x256xbf16, #tpu.memory_space<vmem>>, vector<8x256xbf16>
    %cst_7 = arith.constant dense<0.000000e+00> : vector<256x256xf32>
    %12 = tpu.matmul %10, %11, %cst_7 {dimension_numbers = #tpu.dot_dimension_numbers<[1], [0], [0], [1], [0, 0, 1, 1], [], []>} : vector<256x8xbf16>, vector<8x256xbf16>, vector<256x256xf32> -> vector<256x256xf32>
    %13 = arith.addf %3, %12 : vector<256x256xf32>
    %c0_8 = arith.constant 0 : index
    %c0_9 = arith.constant 0 : index
    %14 = vector.load %arg5[%c0_8, %c0_9] : memref<1x256xf32, #tpu.memory_space<vmem>>, vector<1x256xf32>
    %15 = vector.broadcast %14 : vector<1x256xf32> to vector<256x256xf32>
    %16 = arith.addf %13, %15 : vector<256x256xf32>
    %cst_10 = arith.constant 0.000000e+00 : f32
    %17 = vector.broadcast %cst_10 : f32 to vector<256x256xf32>
    %18 = arith.maximumf %16, %17 : vector<256x256xf32>
    %19 = arith.truncf %18 : vector<256x256xf32> to vector<256x256xbf16>
    %c0_11 = arith.constant 0 : index
    %c0_12 = arith.constant 0 : index
    %20 = vector.load %arg6[%c0_11, %c0_12] : memref<256x128xbf16, #tpu.memory_space<vmem>>, vector<256x128xbf16>
    %cst_13 = arith.constant dense<0.000000e+00> : vector<256x128xf32>
    %21 = tpu.matmul %19, %20, %cst_13 {dimension_numbers = #tpu.dot_dimension_numbers<[1], [0], [0], [1], [0, 0, 1, 1], [], []>} : vector<256x256xbf16>, vector<256x128xbf16>, vector<256x128xf32> -> vector<256x128xf32>
    %c0_14 = arith.constant 0 : index
    %c0_15 = arith.constant 0 : index
    %22 = vector.load %arg7[%c0_14, %c0_15] : memref<1x128xf32, #tpu.memory_space<vmem>>, vector<1x128xf32>
    %23 = vector.broadcast %22 : vector<1x128xf32> to vector<256x128xf32>
    %24 = arith.addf %21, %23 : vector<256x128xf32>
    %c0_16 = arith.constant 0 : index
    %c0_17 = arith.constant 0 : index
    %25 = vector.load %arg8[%c0_16, %c0_17] : memref<256x128xf32, #tpu.memory_space<vmem>>, vector<256x128xf32>
    tpu.vector_store %arg8[%c0_16, %c0_17], %24 {strides = array<i32>} : memref<256x128xf32, #tpu.memory_space<vmem>>, vector<256x128xf32>,
    return
  }
  func.func @transform_0(%arg0: i32) -> (i32, i32) {
    %c0_i32 = arith.constant 0 : i32
    %c0_i32_0 = arith.constant 0 : i32
    return %arg0, %c0_i32 : i32, i32
  }
  func.func @transform_1(%arg0: i32) -> (i32, i32) {
    %c0_i32 = arith.constant 0 : i32
    %c0_i32_0 = arith.constant 0 : i32
    return %arg0, %c0_i32 : i32, i32
  }
  func.func @transform_2(%arg0: i32) -> (i32, i32) {
    %c0_i32 = arith.constant 0 : i32
    %c0_i32_0 = arith.constant 0 : i32
    %c0_i32_1 = arith.constant 0 : i32
    return %c0_i32, %c0_i32_0 : i32, i32
  }
  func.func @transform_3(%arg0: i32) -> (i32, i32) {
    %c0_i32 = arith.constant 0 : i32
    %c0_i32_0 = arith.constant 0 : i32
    %c0_i32_1 = arith.constant 0 : i32
    return %c0_i32, %c0_i32_0 : i32, i32
  }
  func.func @transform_4(%arg0: i32) -> (i32, i32) {
    %c0_i32 = arith.constant 0 : i32
    %c0_i32_0 = arith.constant 0 : i32
    %c0_i32_1 = arith.constant 0 : i32
    return %c0_i32, %c0_i32_0 : i32, i32
  }
  func.func @transform_5(%arg0: i32) -> (i32, i32) {
    %c0_i32 = arith.constant 0 : i32
    %c0_i32_0 = arith.constant 0 : i32
    %c0_i32_1 = arith.constant 0 : i32
    return %c0_i32, %c0_i32_0 : i32, i32
  }
  func.func @transform_6(%arg0: i32) -> (i32, i32) {
    %c0_i32 = arith.constant 0 : i32
    %c0_i32_0 = arith.constant 0 : i32
    %c0_i32_1 = arith.constant 0 : i32
    return %c0_i32, %c0_i32_0 : i32, i32
  }
  func.func @transform_7(%arg0: i32) -> (i32, i32) {
    %c0_i32 = arith.constant 0 : i32
    %c0_i32_0 = arith.constant 0 : i32
    return %arg0, %c0_i32 : i32, i32
  }
}

</mosaic_0001>

<llo_original>
// kernel: tpu_custom_call.1
$region0: #{tpu_custom_call.1}
  #allocation0 [shape = 'u32[]', space=smem, size = 0x4, offset = 0x4, fixed_abs, tag = 'smem constant byte address 0x4 - core index']
  #allocation1 [shape = 'u32[144,128]{1,0:T(1,128)}', space=vmem, size = 0x12000, scoped, tag = 'internal scratch']
  %s0 = inlined_call_operand.vmem [shape: f32[256,32], index: 0, kind: input, shape index: {}]
  %s1 = inlined_call_operand.vmem [shape: s32[256,1], index: 1, kind: input, shape index: {}]
  %s2 = inlined_call_operand.vmem [shape: bf16[32,256], index: 2, kind: input, shape index: {}]
  %s3 = inlined_call_operand.vmem [shape: bf16[8,256], index: 3, kind: input, shape index: {}]
  %s4 = inlined_call_operand.vmem [shape: f32[1,256], index: 4, kind: input, shape index: {}]
  %s5 = inlined_call_operand.vmem [shape: bf16[256,128], index: 5, kind: input, shape index: {}]
  %s6 = inlined_call_operand.vmem [shape: f32[1,128], index: 6, kind: input, shape index: {}]
  %s7 = inlined_call_operand.hbm [shape: f32[256,128], index: 7, kind: output, shape index: {}]
  %s8 = sld [smem:[#allocation0]]
  $region38: #{tpu_custom_call.1} parent=0
    _
  %s10 = ssub.s32 1, %s8
  %s11 = scalar_select 0, %s10, %s8
  $region1: #{tpu_custom_call.1} parent=0
    #allocation2 [shape = 'u8[131072]{0}', space=vmem, size = 0x20000, scoped, tag = 'output window, operand 0, single buffered']
    #allocation3 [shape = 's32[1]{0}', space=sflag, size = 0x4, scoped, tag = 'scoped memory for tpu_custom_call.1']
    %12 = vsyncpa [#allocation3], 0
    // Predicated region
    $region2: #{tpu_custom_call.1} parent=1 // pred_check
      _
    $region3: #{tpu_custom_call.1} parent=1 // pred_check_branch
      %14 = sbr.rel (0) target = $region5
    $region4: #{tpu_custom_call.1} parent=1 // pred_region
      _
    $region5: #{tpu_custom_call.1} parent=1 // pred_fallthru
      _
    // Predicated region
    $region6: #{tpu_custom_call.1} parent=1 // pred_check
      _
    $region7: #{tpu_custom_call.1} parent=1 // pred_check_branch
      %16 = sbr.rel (0) target = $region9
    $region8: #{tpu_custom_call.1} parent=1 // pred_region
      _
    $region9: #{tpu_custom_call.1} parent=1 // pred_fallthru
      _
    // Predicated region
    $region10: #{tpu_custom_call.1} parent=1 // pred_check
      _
    $region11: #{tpu_custom_call.1} parent=1 // pred_check_branch
      %18 = sbr.rel (0) target = $region13
    $region12: #{tpu_custom_call.1} parent=1 // pred_region
      _
    $region13: #{tpu_custom_call.1} parent=1 // pred_fallthru
      _
    // Predicated region
    $region14: #{tpu_custom_call.1} parent=1 // pred_check
      _
    $region15: #{tpu_custom_call.1} parent=1 // pred_check_branch
      %20 = sbr.rel (0) target = $region17
    $region16: #{tpu_custom_call.1} parent=1 // pred_region
      _
    $region17: #{tpu_custom_call.1} parent=1 // pred_fallthru
      _
    // Predicated region
    $region18: #{tpu_custom_call.1} parent=1 // pred_check
      _
    $region19: #{tpu_custom_call.1} parent=1 // pred_check_branch
      %22 = sbr.rel (0) target = $region21
    $region20: #{tpu_custom_call.1} parent=1 // pred_region
      _
    $region21: #{tpu_custom_call.1} parent=1 // pred_fallthru
      _
    // Predicated region
    $region22: #{tpu_custom_call.1} parent=1 // pred_check
      _
    $region23: #{tpu_custom_call.1} parent=1 // pred_check_branch
      %24 = sbr.rel (0) target = $region25
    $region24: #{tpu_custom_call.1} parent=1 // pred_region
      _
    $region25: #{tpu_custom_call.1} parent=1 // pred_fallthru
      _
    // Predicated region
    $region26: #{tpu_custom_call.1} parent=1 // pred_check
      _
    $region27: #{tpu_custom_call.1} parent=1 // pred_check_branch
      %26 = sbr.rel (0) target = $region29
    $region28: #{tpu_custom_call.1} parent=1 // pred_region
      _
    $region29: #{tpu_custom_call.1} parent=1 // pred_fallthru
      _
    %v28 = vld [vmem:[%s0] sm:$0xff]
    %v29 = vld [vmem:[%s0 + $0x8] sm:$0xff]
    %v30 = vld [vmem:[%s0 + $0x10] sm:$0xff]
    %v31 = vld [vmem:[%s0 + $0x18] sm:$0xff]
    %v32 = vld [vmem:[%s0 + $0x20] sm:$0xff]
    %v33 = vld [vmem:[%s0 + $0x28] sm:$0xff]
    %v34 = vld [vmem:[%s0 + $0x30] sm:$0xff]
    %v35 = vld [vmem:[%s0 + $0x38] sm:$0xff]
    %v36 = vld [vmem:[%s0 + $0x40] sm:$0xff]
    %v37 = vld [vmem:[%s0 + $0x48] sm:$0xff]
    %v38 = vld [vmem:[%s0 + $0x50] sm:$0xff]
    %v39 = vld [vmem:[%s0 + $0x58] sm:$0xff]
    %v40 = vld [vmem:[%s0 + $0x60] sm:$0xff]
    %v41 = vld [vmem:[%s0 + $0x68] sm:$0xff]
    %v42 = vld [vmem:[%s0 + $0x70] sm:$0xff]
    %v43 = vld [vmem:[%s0 + $0x78] sm:$0xff]
    %v44 = vld [vmem:[%s0 + $0x80] sm:$0xff]
    %v45 = vld [vmem:[%s0 + $0x88] sm:$0xff]
    %v46 = vld [vmem:[%s0 + $0x90] sm:$0xff]
    %v47 = vld [vmem:[%s0 + $0x98] sm:$0xff]
    %v48 = vld [vmem:[%s0 + $0xa0] sm:$0xff]
    %v49 = vld [vmem:[%s0 + $0xa8] sm:$0xff]
    %v50 = vld [vmem:[%s0 + $0xb0] sm:$0xff]
    %v51 = vld [vmem:[%s0 + $0xb8] sm:$0xff]
    %v52 = vld [vmem:[%s0 + $0xc0] sm:$0xff]
    %v53 = vld [vmem:[%s0 + $0xc8] sm:$0xff]
    %v54 = vld [vmem:[%s0 + $0xd0] sm:$0xff]
    %v55 = vld [vmem:[%s0 + $0xd8] sm:$0xff]
    %v56 = vld [vmem:[%s0 + $0xe0] sm:$0xff]
    %v57 = vld [vmem:[%s0 + $0xe8] sm:$0xff]
    %v58 = vld [vmem:[%s0 + $0xf0] sm:$0xff]
    %v59 = vld [vmem:[%s0 + $0xf8] sm:$0xff]
    %v60 = vpack.c.bf16 %v29, %v28
    %v61 = vpack.c.bf16 %v31, %v30
    %v62 = vpack.c.bf16 %v33, %v32
    %v63 = vpack.c.bf16 %v35, %v34
    %v64 = vpack.c.bf16 %v37, %v36
    %v65 = vpack.c.bf16 %v39, %v38
    %v66 = vpack.c.bf16 %v41, %v40
    %v67 = vpack.c.bf16 %v43, %v42
    %v68 = vpack.c.bf16 %v45, %v44
    %v69 = vpack.c.bf16 %v47, %v46
    %v70 = vpack.c.bf16 %v49, %v48
    %v71 = vpack.c.bf16 %v51, %v50
    %v72 = vpack.c.bf16 %v53, %v52
    %v73 = vpack.c.bf16 %v55, %v54
    %v74 = vpack.c.bf16 %v57, %v56
    %v75 = vpack.c.bf16 %v59, %v58
    %v76 = vld [vmem:[%s2] sm:$0xff]
    %v77 = vld [vmem:[%s2 + $0x8] sm:$0xff]
    %v78 = vld [vmem:[%s2 + $0x10] sm:$0xff]
    %v79 = vld [vmem:[%s2 + $0x18] sm:$0xff]
    %v80 = vlaneseq
    %v81 = vand.u32 %v80, 127
    %v82 = vld [vmem:[%s1] sm:$0xff]
    %v83 = vld [vmem:[%s1 + $0x8] sm:$0xff]
    %v84 = vld [vmem:[%s1 + $0x10] sm:$0xff]
    %v85 = vld [vmem:[%s1 + $0x18] sm:$0xff]
    %v86 = vld [vmem:[%s1 + $0x20] sm:$0xff]
    %v87 = vld [vmem:[%s1 + $0x28] sm:$0xff]
    %v88 = vld [vmem:[%s1 + $0x30] sm:$0xff]
    %v89 = vld [vmem:[%s1 + $0x38] sm:$0xff]
    %v90 = vld [vmem:[%s1 + $0x40] sm:$0xff]
    %v91 = vld [vmem:[%s1 + $0x48] sm:$0xff]
    %v92 = vld [vmem:[%s1 + $0x50] sm:$0xff]
    %v93 = vld [vmem:[%s1 + $0x58] sm:$0xff]
    %v94 = vld [vmem:[%s1 + $0x60] sm:$0xff]
    %v95 = vld [vmem:[%s1 + $0x68] sm:$0xff]
    %v96 = vld [vmem:[%s1 + $0x70] sm:$0xff]
    %v97 = vld [vmem:[%s1 + $0x78] sm:$0xff]
    %v98 = vld [vmem:[%s1 + $0x80] sm:$0xff]
    %v99 = vld [vmem:[%s1 + $0x88] sm:$0xff]
    %v100 = vld [vmem:[%s1 + $0x90] sm:$0xff]
    %v101 = vld [vmem:[%s1 + $0x98] sm:$0xff]
    %v102 = vld [vmem:[%s1 + $0xa0] sm:$0xff]
    %v103 = vld [vmem:[%s1 + $0xa8] sm:$0xff]
    %v104 = vld [vmem:[%s1 + $0xb0] sm:$0xff]
    %v105 = vld [vmem:[%s1 + $0xb8] sm:$0xff]
    %v106 = vld [vmem:[%s1 + $0xc0] sm:$0xff]
    %v107 = vld [vmem:[%s1 + $0xc8] sm:$0xff]
    %v108 = vld [vmem:[%s1 + $0xd0] sm:$0xff]
    %v109 = vld [vmem:[%s1 + $0xd8] sm:$0xff]
    %v110 = vld [vmem:[%s1 + $0xe0] sm:$0xff]
    %v111 = vld [vmem:[%s1 + $0xe8] sm:$0xff]
    %v112 = vld [vmem:[%s1 + $0xf0] sm:$0xff]
    %v113 = vld [vmem:[%s1 + $0xf8] sm:$0xff]
    %114 = vset.pattern.permute.xlu0 0
    %115 = vperm.xlu0 %114, %v82
    %v116 = vpop.permute.xlu0 %115
    %117 = vset.pattern.permute.xlu0 0
    %118 = vperm.xlu0 %117, %v83
    %v119 = vpop.permute.xlu0 %118
    %120 = vset.pattern.permute.xlu0 0
    %121 = vperm.xlu0 %120, %v84
    %v122 = vpop.permute.xlu0 %121
    %123 = vset.pattern.permute.xlu0 0
    %124 = vperm.xlu0 %123, %v85
    %v125 = vpop.permute.xlu0 %124
    %126 = vset.pattern.permute.xlu0 0
    %127 = vperm.xlu0 %126, %v86
    %v128 = vpop.permute.xlu0 %127
    %129 = vset.pattern.permute.xlu0 0
    %130 = vperm.xlu0 %129, %v87
    %v131 = vpop.permute.xlu0 %130
    %132 = vset.pattern.permute.xlu0 0
    %133 = vperm.xlu0 %132, %v88
    %v134 = vpop.permute.xlu0 %133
    %135 = vset.pattern.permute.xlu0 0
    %136 = vperm.xlu0 %135, %v89
    %v137 = vpop.permute.xlu0 %136
    %138 = vset.pattern.permute.xlu0 0
    %139 = vperm.xlu0 %138, %v90
    %v140 = vpop.permute.xlu0 %139
    %141 = vset.pattern.permute.xlu0 0
    %142 = vperm.xlu0 %141, %v91
    %v143 = vpop.permute.xlu0 %142
    %144 = vset.pattern.permute.xlu0 0
    %145 = vperm.xlu0 %144, %v92
    %v146 = vpop.permute.xlu0 %145
    %147 = vset.pattern.permute.xlu0 0
    %148 = vperm.xlu0 %147, %v93
    %v149 = vpop.permute.xlu0 %148
    %150 = vset.pattern.permute.xlu0 0
    %151 = vperm.xlu0 %150, %v94
    %v152 = vpop.permute.xlu0 %151
    %153 = vset.pattern.permute.xlu0 0
    %154 = vperm.xlu0 %153, %v95
    %v155 = vpop.permute.xlu0 %154
    %156 = vset.pattern.permute.xlu0 0
    %157 = vperm.xlu0 %156, %v96
    %v158 = vpop.permute.xlu0 %157
    %159 = vset.pattern.permute.xlu0 0
    %160 = vperm.xlu0 %159, %v97
    %v161 = vpop.permute.xlu0 %160
    %162 = vset.pattern.permute.xlu0 0
    %163 = vperm.xlu0 %162, %v98
    %v164 = vpop.permute.xlu0 %163
    %165 = vset.pattern.permute.xlu0 0
    %166 = vperm.xlu0 %165, %v99
    %v167 = vpop.permute.xlu0 %166
    %168 = vset.pattern.permute.xlu0 0
    %169 = vperm.xlu0 %168, %v100
    %v170 = vpop.permute.xlu0 %169
    %171 = vset.pattern.permute.xlu0 0
    %172 = vperm.xlu0 %171, %v101
    %v173 = vpop.permute.xlu0 %172
    %174 = vset.pattern.permute.xlu0 0
    %175 = vperm.xlu0 %174, %v102
    %v176 = vpop.permute.xlu0 %175
    %177 = vset.pattern.permute.xlu0 0
    %178 = vperm.xlu0 %177, %v103
    %v179 = vpop.permute.xlu0 %178
    %180 = vset.pattern.permute.xlu0 0
    %181 = vperm.xlu0 %180, %v104
    %v182 = vpop.permute.xlu0 %181
    %183 = vset.pattern.permute.xlu0 0
    %184 = vperm.xlu0 %183, %v105
    %v185 = vpop.permute.xlu0 %184
    %186 = vset.pattern.permute.xlu0 0
    %187 = vperm.xlu0 %186, %v106
    %v188 = vpop.permute.xlu0 %187
    %189 = vset.pattern.permute.xlu0 0
    %190 = vperm.xlu0 %189, %v107
    %v191 = vpop.permute.xlu0 %190
    %192 = vset.pattern.permute.xlu0 0
    %193 = vperm.xlu0 %192, %v108
    %v194 = vpop.permute.xlu0 %193
    %195 = vset.pattern.permute.xlu0 0
    %196 = vperm.xlu0 %195, %v109
    %v197 = vpop.permute.xlu0 %196
    %198 = vset.pattern.permute.xlu0 0
    %199 = vperm.xlu0 %198, %v110
    %v200 = vpop.permute.xlu0 %199
    %201 = vset.pattern.permute.xlu0 0
    %202 = vperm.xlu0 %201, %v111
    %v203 = vpop.permute.xlu0 %202
    %204 = vset.pattern.permute.xlu0 0
    %205 = vperm.xlu0 %204, %v112
    %v206 = vpop.permute.xlu0 %205
    %207 = vset.pattern.permute.xlu0 0
    %208 = vperm.xlu0 %207, %v113
    %v209 = vpop.permute.xlu0 %208
    %vm210 = vcmp.eq.s32.totalorder %v81, %v116
    %vm211 = vcmp.eq.s32.totalorder %v81, %v119
    %vm212 = vcmp.eq.s32.totalorder %v81, %v122
    %vm213 = vcmp.eq.s32.totalorder %v81, %v125
    %vm214 = vcmp.eq.s32.totalorder %v81, %v128
    %vm215 = vcmp.eq.s32.totalorder %v81, %v131
    %vm216 = vcmp.eq.s32.totalorder %v81, %v134
    %vm217 = vcmp.eq.s32.totalorder %v81, %v137
    %vm218 = vcmp.eq.s32.totalorder %v81, %v140
    %vm219 = vcmp.eq.s32.totalorder %v81, %v143
    %vm220 = vcmp.eq.s32.totalorder %v81, %v146
    %vm221 = vcmp.eq.s32.totalorder %v81, %v149
    %vm222 = vcmp.eq.s32.totalorder %v81, %v152
    %vm223 = vcmp.eq.s32.totalorder %v81, %v155
    %vm224 = vcmp.eq.s32.totalorder %v81, %v158
    %vm225 = vcmp.eq.s32.totalorder %v81, %v161
    %vm226 = vcmp.eq.s32.totalorder %v81, %v164
    %vm227 = vcmp.eq.s32.totalorder %v81, %v167
    %vm228 = vcmp.eq.s32.totalorder %v81, %v170
    %vm229 = vcmp.eq.s32.totalorder %v81, %v173
    %vm230 = vcmp.eq.s32.totalorder %v81, %v176
    %vm231 = vcmp.eq.s32.totalorder %v81, %v179
    %vm232 = vcmp.eq.s32.totalorder %v81, %v182
    %vm233 = vcmp.eq.s32.totalorder %v81, %v185
    %vm234 = vcmp.eq.s32.totalorder %v81, %v188
    %vm235 = vcmp.eq.s32.totalorder %v81, %v191
    %vm236 = vcmp.eq.s32.totalorder %v81, %v194
    %vm237 = vcmp.eq.s32.totalorder %v81, %v197
    %vm238 = vcmp.eq.s32.totalorder %v81, %v200
    %vm239 = vcmp.eq.s32.totalorder %v81, %v203
    %vm240 = vcmp.eq.s32.totalorder %v81, %v206
    %vm241 = vcmp.eq.s32.totalorder %v81, %v209
    %v242 = vsel %vm210, 1, 0
    %v243 = vsel %vm211, 1, 0
    %v244 = vsel %vm212, 1, 0
    %v245 = vsel %vm213, 1, 0
    %v246 = vsel %vm214, 1, 0
    %v247 = vsel %vm215, 1, 0
    %v248 = vsel %vm216, 1, 0
    %v249 = vsel %vm217, 1, 0
    %v250 = vsel %vm218, 1, 0
    %v251 = vsel %vm219, 1, 0
    %v252 = vsel %vm220, 1, 0
    %v253 = vsel %vm221, 1, 0
    %v254 = vsel %vm222, 1, 0
    %v255 = vsel %vm223, 1, 0
    %v256 = vsel %vm224, 1, 0
    %v257 = vsel %vm225, 1, 0
    %v258 = vsel %vm226, 1, 0
    %v259 = vsel %vm227, 1, 0
    %v260 = vsel %vm228, 1, 0
    %v261 = vsel %vm229, 1, 0
    %v262 = vsel %vm230, 1, 0
    %v263 = vsel %vm231, 1, 0
    %v264 = vsel %vm232, 1, 0
    %v265 = vsel %vm233, 1, 0
    %v266 = vsel %vm234, 1, 0
    %v267 = vsel %vm235, 1, 0
    %v268 = vsel %vm236, 1, 0
    %v269 = vsel %vm237, 1, 0
    %v270 = vsel %vm238, 1, 0
    %v271 = vsel %vm239, 1, 0
    %v272 = vsel %vm240, 1, 0
    %v273 = vsel %vm241, 1, 0
    %v274 = vcvt.s32.f32 %v242
    %v275 = vcvt.s32.f32 %v243
    %v276 = vcvt.s32.f32 %v244
    %v277 = vcvt.s32.f32 %v245
    %v278 = vcvt.s32.f32 %v246
    %v279 = vcvt.s32.f32 %v247
    %v280 = vcvt.s32.f32 %v248
    %v281 = vcvt.s32.f32 %v249
    %v282 = vcvt.s32.f32 %v250
    %v283 = vcvt.s32.f32 %v251
    %v284 = vcvt.s32.f32 %v252
    %v285 = vcvt.s32.f32 %v253
    %v286 = vcvt.s32.f32 %v254
    %v287 = vcvt.s32.f32 %v255
    %v288 = vcvt.s32.f32 %v256
    %v289 = vcvt.s32.f32 %v257
    %v290 = vcvt.s32.f32 %v258
    %v291 = vcvt.s32.f32 %v259
    %v292 = vcvt.s32.f32 %v260
    %v293 = vcvt.s32.f32 %v261
    %v294 = vcvt.s32.f32 %v262
    %v295 = vcvt.s32.f32 %v263
    %v296 = vcvt.s32.f32 %v264
    %v297 = vcvt.s32.f32 %v265
    %v298 = vcvt.s32.f32 %v266
    %v299 = vcvt.s32.f32 %v267
    %v300 = vcvt.s32.f32 %v268
    %v301 = vcvt.s32.f32 %v269
    %v302 = vcvt.s32.f32 %v270
    %v303 = vcvt.s32.f32 %v271
    %v304 = vcvt.s32.f32 %v272
    %v305 = vcvt.s32.f32 %v273
    %v306 = vpack.c.bf16 %v275, %v274
    %v307 = vpack.c.bf16 %v277, %v276
    %v308 = vpack.c.bf16 %v279, %v278
    %v309 = vpack.c.bf16 %v281, %v280
    %v310 = vpack.c.bf16 %v283, %v282
    %v311 = vpack.c.bf16 %v285, %v284
    %v312 = vpack.c.bf16 %v287, %v286
    %v313 = vpack.c.bf16 %v289, %v288
    %v314 = vpack.c.bf16 %v291, %v290
    %v315 = vpack.c.bf16 %v293, %v292
    %v316 = vpack.c.bf16 %v295, %v294
    %v317 = vpack.c.bf16 %v297, %v296
    %v318 = vpack.c.bf16 %v299, %v298
    %v319 = vpack.c.bf16 %v301, %v300
    %v320 = vpack.c.bf16 %v303, %v302
    %v321 = vpack.c.bf16 %v305, %v304
    %v322 = vld [vmem:[%s3] sm:$0xff]
    %v324 = vunpack.c.l.b16 %v322
    %v325 = vunpack.c.h.b16 %v322
    %v326 = vpack.c.b16 %v324, %v324
    %v327 = vpack.c.b16 %v325, %v325
    %vm328 = vcmask 64512
    %v330 = vsel %vm328, %v306, 0
    %v333 = vsel %vm328, %v307, 0
    %v336 = vsel %vm328, %v308, 0
    %v339 = vsel %vm328, %v309, 0
    %v342 = vsel %vm328, %v310, 0
    %v345 = vsel %vm328, %v311, 0
    %v348 = vsel %vm328, %v312, 0
    %v351 = vsel %vm328, %v313, 0
    %v354 = vsel %vm328, %v314, 0
    %v357 = vsel %vm328, %v315, 0
    %v360 = vsel %vm328, %v316, 0
    %v363 = vsel %vm328, %v317, 0
    %v366 = vsel %vm328, %v318, 0
    %v369 = vsel %vm328, %v319, 0
    %v372 = vsel %vm328, %v320, 0
    %v375 = vsel %vm328, %v321, 0
    %vm377 = vcmask 1043456
    %v379 = vsel %vm377, %v326, 0
    %v382 = vsel %vm377, %v327, 0
    %384 = vmatprep.subr.bf16.mxu0 0
    %385 = vmatpush1.bf16.msra.mxu0 0
    %386 = vmatprep.subr.bf16.mxu0 0
    %387 = vmatpush1.bf16.msra.mxu0 0
    %388 = vmatprep.subr.bf16.mxu0 0
    %389 = vmatpush1.bf16.msra.mxu0 0
    %390 = vmatprep.subr.bf16.mxu0 0
    %391 = vmatpush1.bf16.msra.mxu0 0
    %392 = vmatprep.subr.bf16.mxu0 0
    %393 = vmatpush1.bf16.msra.mxu0 0
    %394 = vmatprep.subr.bf16.mxu0 0
    %395 = vmatpush1.bf16.msra.mxu0 0
    %396 = vmatprep.subr.bf16.mxu0 0
    %397 = vmatpush1.bf16.msra.mxu0 0
    %398 = vmatprep.subr.bf16.mxu0 %v382
    %399 = vmatpush1.bf16.msra.mxu0 %v379
    %400 = vmatprep.subr.bf16.mxu0 0
    %401 = vmatpush2.bf16.msra.mxu0 0
    %402 = vmatprep.subr.bf16.mxu0 0
    %403 = vmatpush2.bf16.msra.mxu0 0
    %404 = vmatprep.subr.bf16.mxu0 0
    %405 = vmatpush2.bf16.msra.mxu0 0
    %406 = vmatprep.subr.bf16.mxu0 0
    %407 = vmatpush2.bf16.msra.mxu0 0
    %408 = vmatprep.subr.bf16.mxu0 0
    %409 = vmatpush2.bf16.msra.mxu0 0
    %410 = vmatprep.subr.bf16.mxu0 0
    %411 = vmatpush2.bf16.msra.mxu0 0
    %412 = vmatprep.subr.bf16.mxu0 0
    %413 = vmatpush2.bf16.msra.mxu0 0
    %414 = vmatprep.subr.bf16.mxu0 0
    %415 = vmatpush2.bf16.msra.mxu0 0
    %416 = vmatprep.mubr.bf16.mxu0 0
    %417 = vmatmul.mubr.bf16.gmra.mxu0 %v330
    %v418 = vpop.f32.mrf.mxu0
    %v419 = vadd.f32 0.0, %v418
    %v420 = vpop.f32.mrf.mxu0
    %v421 = vadd.f32 0.0, %v420
    %v422 = vpop.f32.mrf.mxu0
    %v423 = vadd.f32 0.0, %v422
    %v424 = vpop.f32.mrf.mxu0
    %v425 = vadd.f32 0.0, %v424
    %426 = vmatprep.mubr.bf16.mxu0 0
    %427 = vmatmul.mubr.bf16.gmra.mxu0 %v333
    %v428 = vpop.f32.mrf.mxu0
    %v429 = vadd.f32 0.0, %v428
    %v430 = vpop.f32.mrf.mxu0
    %v431 = vadd.f32 0.0, %v430
    %v432 = vpop.f32.mrf.mxu0
    %v433 = vadd.f32 0.0, %v432
    %v434 = vpop.f32.mrf.mxu0
    %v435 = vadd.f32 0.0, %v434
    %436 = vmatprep.mubr.bf16.mxu0 0
    %437 = vmatmul.mubr.bf16.gmra.mxu0 %v336
    %v438 = vpop.f32.mrf.mxu0
    %v439 = vadd.f32 0.0, %v438
    %v440 = vpop.f32.mrf.mxu0
    %v441 = vadd.f32 0.0, %v440
    %v442 = vpop.f32.mrf.mxu0
    %v443 = vadd.f32 0.0, %v442
    %v444 = vpop.f32.mrf.mxu0
    %v445 = vadd.f32 0.0, %v444
    %446 = vmatprep.mubr.bf16.mxu0 0
    %447 = vmatmul.mubr.bf16.gmra.mxu0 %v339
    %v448 = vpop.f32.mrf.mxu0
    %v449 = vadd.f32 0.0, %v448
    %v450 = vpop.f32.mrf.mxu0
    %v451 = vadd.f32 0.0, %v450
    %v452 = vpop.f32.mrf.mxu0
    %v453 = vadd.f32 0.0, %v452
    %v454 = vpop.f32.mrf.mxu0
    %v455 = vadd.f32 0.0, %v454
    %456 = vmatprep.mubr.bf16.mxu0 0
    %457 = vmatmul.mubr.bf16.gmra.mxu0 %v342
    %v458 = vpop.f32.mrf.mxu0
    %v459 = vadd.f32 0.0, %v458
    %v460 = vpop.f32.mrf.mxu0
    %v461 = vadd.f32 0.0, %v460
    %v462 = vpop.f32.mrf.mxu0
    %v463 = vadd.f32 0.0, %v462
    %v464 = vpop.f32.mrf.mxu0
    %v465 = vadd.f32 0.0, %v464
    %466 = vmatprep.mubr.bf16.mxu0 0
    %467 = vmatmul.mubr.bf16.gmra.mxu0 %v345
    %v468 = vpop.f32.mrf.mxu0
    %v469 = vadd.f32 0.0, %v468
    %v470 = vpop.f32.mrf.mxu0
    %v471 = vadd.f32 0.0, %v470
    %v472 = vpop.f32.mrf.mxu0
    %v473 = vadd.f32 0.0, %v472
    %v474 = vpop.f32.mrf.mxu0
    %v475 = vadd.f32 0.0, %v474
    %476 = vmatprep.mubr.bf16.mxu0 0
    %477 = vmatmul.mubr.bf16.gmra.mxu0 %v348
    %v478 = vpop.f32.mrf.mxu0
    %v479 = vadd.f32 0.0, %v478
    %v480 = vpop.f32.mrf.mxu0
    %v481 = vadd.f32 0.0, %v480
    %v482 = vpop.f32.mrf.mxu0
    %v483 = vadd.f32 0.0, %v482
    %v484 = vpop.f32.mrf.mxu0
    %v485 = vadd.f32 0.0, %v484
    %486 = vmatprep.mubr.bf16.mxu0 0
    %487 = vmatmul.mubr.bf16.gmra.mxu0 %v351
    %v488 = vpop.f32.mrf.mxu0
    %v489 = vadd.f32 0.0, %v488
    %v490 = vpop.f32.mrf.mxu0
    %v491 = vadd.f32 0.0, %v490
    %v492 = vpop.f32.mrf.mxu0
    %v493 = vadd.f32 0.0, %v492
    %v494 = vpop.f32.mrf.mxu0
    %v495 = vadd.f32 0.0, %v494
    %496 = vmatprep.mubr.bf16.mxu0 0
    %497 = vmatmul.mubr.bf16.gmra.mxu0 %v354
    %v498 = vpop.f32.mrf.mxu0
    %v499 = vadd.f32 0.0, %v498
    %v500 = vpop.f32.mrf.mxu0
    %v501 = vadd.f32 0.0, %v500
    %v502 = vpop.f32.mrf.mxu0
    %v503 = vadd.f32 0.0, %v502
    %v504 = vpop.f32.mrf.mxu0
    %v505 = vadd.f32 0.0, %v504
    %506 = vmatprep.mubr.bf16.mxu0 0
    %507 = vmatmul.mubr.bf16.gmra.mxu0 %v357
    %v508 = vpop.f32.mrf.mxu0
    %v509 = vadd.f32 0.0, %v508
    %v510 = vpop.f32.mrf.mxu0
    %v511 = vadd.f32 0.0, %v510
    %v512 = vpop.f32.mrf.mxu0
    %v513 = vadd.f32 0.0, %v512
    %v514 = vpop.f32.mrf.mxu0
    %v515 = vadd.f32 0.0, %v514
    %516 = vmatprep.mubr.bf16.mxu0 0
    %517 = vmatmul.mubr.bf16.gmra.mxu0 %v360
    %v518 = vpop.f32.mrf.mxu0
    %v519 = vadd.f32 0.0, %v518
    %v520 = vpop.f32.mrf.mxu0
    %v521 = vadd.f32 0.0, %v520
    %v522 = vpop.f32.mrf.mxu0
    %v523 = vadd.f32 0.0, %v522
    %v524 = vpop.f32.mrf.mxu0
    %v525 = vadd.f32 0.0, %v524
    %526 = vmatprep.mubr.bf16.mxu0 0
    %527 = vmatmul.mubr.bf16.gmra.mxu0 %v363
    %v528 = vpop.f32.mrf.mxu0
    %v529 = vadd.f32 0.0, %v528
    %v530 = vpop.f32.mrf.mxu0
    %v531 = vadd.f32 0.0, %v530
    %v532 = vpop.f32.mrf.mxu0
    %v533 = vadd.f32 0.0, %v532
    %v534 = vpop.f32.mrf.mxu0
    %v535 = vadd.f32 0.0, %v534
    %536 = vmatprep.mubr.bf16.mxu0 0
    %537 = vmatmul.mubr.bf16.gmra.mxu0 %v366
    %v538 = vpop.f32.mrf.mxu0
    %v539 = vadd.f32 0.0, %v538
    %v540 = vpop.f32.mrf.mxu0
    %v541 = vadd.f32 0.0, %v540
    %v542 = vpop.f32.mrf.mxu0
    %v543 = vadd.f32 0.0, %v542
    %v544 = vpop.f32.mrf.mxu0
    %v545 = vadd.f32 0.0, %v544
    %546 = vmatprep.mubr.bf16.mxu0 0
    %547 = vmatmul.mubr.bf16.gmra.mxu0 %v369
    %v548 = vpop.f32.mrf.mxu0
    %v549 = vadd.f32 0.0, %v548
    %v550 = vpop.f32.mrf.mxu0
    %v551 = vadd.f32 0.0, %v550
    %v552 = vpop.f32.mrf.mxu0
    %v553 = vadd.f32 0.0, %v552
    %v554 = vpop.f32.mrf.mxu0
    %v555 = vadd.f32 0.0, %v554
    %556 = vmatprep.mubr.bf16.mxu0 0
    %557 = vmatmul.mubr.bf16.gmra.mxu0 %v372
    %v558 = vpop.f32.mrf.mxu0
    %v559 = vadd.f32 0.0, %v558
    %v560 = vpop.f32.mrf.mxu0
    %v561 = vadd.f32 0.0, %v560
    %v562 = vpop.f32.mrf.mxu0
    %v563 = vadd.f32 0.0, %v562
    %v564 = vpop.f32.mrf.mxu0
    %v565 = vadd.f32 0.0, %v564
    %566 = vmatprep.mubr.bf16.mxu0 0
    %567 = vmatmul.mubr.bf16.gmra.mxu0 %v375
    %v568 = vpop.f32.mrf.mxu0
    %v569 = vadd.f32 0.0, %v568
    %v570 = vpop.f32.mrf.mxu0
    %v571 = vadd.f32 0.0, %v570
    %v572 = vpop.f32.mrf.mxu0
    %v573 = vadd.f32 0.0, %v572
    %v574 = vpop.f32.mrf.mxu0
    %v575 = vadd.f32 0.0, %v574
    %576 = vdwg.mxu0
    %v581 = vunpack.c.l.b16 %v76
    %v582 = vunpack.c.h.b16 %v76
    %v583 = vunpack.c.l.b16 %v77
    %v584 = vunpack.c.h.b16 %v77
    %v585 = vunpack.c.l.b16 %v78
    %v586 = vunpack.c.h.b16 %v78
    %v587 = vunpack.c.l.b16 %v79
    %v588 = vunpack.c.h.b16 %v79
    %v589 = vpack.c.b16 %v583, %v581
    %v590 = vpack.c.b16 %v584, %v582
    %v591 = vpack.c.b16 %v587, %v585
    %v592 = vpack.c.b16 %v588, %v586
    %vm597 = vcmask 261120
    %v599 = vsel %vm597, %v60, 0
    %v602 = vsel %vm597, %v61, 0
    %v605 = vsel %vm597, %v62, 0
    %v608 = vsel %vm597, %v63, 0
    %v611 = vsel %vm597, %v64, 0
    %v614 = vsel %vm597, %v65, 0
    %v617 = vsel %vm597, %v66, 0
    %v620 = vsel %vm597, %v67, 0
    %v623 = vsel %vm597, %v68, 0
    %v626 = vsel %vm597, %v69, 0
    %v629 = vsel %vm597, %v70, 0
    %v632 = vsel %vm597, %v71, 0
    %v635 = vsel %vm597, %v72, 0
    %v638 = vsel %vm597, %v73, 0
    %v641 = vsel %vm597, %v74, 0
    %v644 = vsel %vm597, %v75, 0
    %646 = vmatprep.subr.bf16.mxu0 0
    %647 = vmatpush1.bf16.msra.mxu0 0
    %648 = vmatprep.subr.bf16.mxu0 0
    %649 = vmatpush1.bf16.msra.mxu0 0
    %650 = vmatprep.subr.bf16.mxu0 0
    %651 = vmatpush1.bf16.msra.mxu0 0
    %652 = vmatprep.subr.bf16.mxu0 0
    %653 = vmatpush1.bf16.msra.mxu0 0
    %654 = vmatprep.subr.bf16.mxu0 0
    %655 = vmatpush1.bf16.msra.mxu0 0
    %656 = vmatprep.subr.bf16.mxu0 0
    %657 = vmatpush1.bf16.msra.mxu0 0
    %658 = vmatprep.subr.bf16.mxu0 %v592
    %659 = vmatpush1.bf16.msra.mxu0 %v591
    %660 = vmatprep.subr.bf16.mxu0 %v590
    %661 = vmatpush1.bf16.msra.mxu0 %v589
    %662 = vmatprep.subr.bf16.mxu0 0
    %663 = vmatpush2.bf16.msra.mxu0 0
    %664 = vmatprep.subr.bf16.mxu0 0
    %665 = vmatpush2.bf16.msra.mxu0 0
    %666 = vmatprep.subr.bf16.mxu0 0
    %667 = vmatpush2.bf16.msra.mxu0 0
    %668 = vmatprep.subr.bf16.mxu0 0
    %669 = vmatpush2.bf16.msra.mxu0 0
    %670 = vmatprep.subr.bf16.mxu0 0
    %671 = vmatpush2.bf16.msra.mxu0 0
    %672 = vmatprep.subr.bf16.mxu0 0
    %673 = vmatpush2.bf16.msra.mxu0 0
    %674 = vmatprep.subr.bf16.mxu0 0
    %675 = vmatpush2.bf16.msra.mxu0 0
    %676 = vmatprep.subr.bf16.mxu0 0
    %677 = vmatpush2.bf16.msra.mxu0 0
    %678 = vmatprep.mubr.bf16.mxu0 0
    %679 = vmatmul.mubr.bf16.gmra.mxu0 %v599
    %v680 = vpop.f32.mrf.mxu0
    %v681 = vadd.f32 %v419, %v680
    %v682 = vpop.f32.mrf.mxu0
    %v683 = vadd.f32 %v421, %v682
    %v684 = vpop.f32.mrf.mxu0
    %v685 = vadd.f32 %v423, %v684
    %v686 = vpop.f32.mrf.mxu0
    %v687 = vadd.f32 %v425, %v686
    %688 = vmatprep.mubr.bf16.mxu0 0
    %689 = vmatmul.mubr.bf16.gmra.mxu0 %v602
    %v690 = vpop.f32.mrf.mxu0
    %v691 = vadd.f32 %v429, %v690
    %v692 = vpop.f32.mrf.mxu0
    %v693 = vadd.f32 %v431, %v692
    %v694 = vpop.f32.mrf.mxu0
    %v695 = vadd.f32 %v433, %v694
    %v696 = vpop.f32.mrf.mxu0
    %v697 = vadd.f32 %v435, %v696
    %698 = vmatprep.mubr.bf16.mxu0 0
    %699 = vmatmul.mubr.bf16.gmra.mxu0 %v605
    %v700 = vpop.f32.mrf.mxu0
    %v701 = vadd.f32 %v439, %v700
    %v702 = vpop.f32.mrf.mxu0
    %v703 = vadd.f32 %v441, %v702
    %v704 = vpop.f32.mrf.mxu0
    %v705 = vadd.f32 %v443, %v704
    %v706 = vpop.f32.mrf.mxu0
    %v707 = vadd.f32 %v445, %v706
    %708 = vmatprep.mubr.bf16.mxu0 0
    %709 = vmatmul.mubr.bf16.gmra.mxu0 %v608
    %v710 = vpop.f32.mrf.mxu0
    %v711 = vadd.f32 %v449, %v710
    %v712 = vpop.f32.mrf.mxu0
    %v713 = vadd.f32 %v451, %v712
    %v714 = vpop.f32.mrf.mxu0
    %v715 = vadd.f32 %v453, %v714
    %v716 = vpop.f32.mrf.mxu0
    %v717 = vadd.f32 %v455, %v716
    %718 = vmatprep.mubr.bf16.mxu0 0
    %719 = vmatmul.mubr.bf16.gmra.mxu0 %v611
    %v720 = vpop.f32.mrf.mxu0
    %v721 = vadd.f32 %v459, %v720
    %v722 = vpop.f32.mrf.mxu0
    %v723 = vadd.f32 %v461, %v722
    %v724 = vpop.f32.mrf.mxu0
    %v725 = vadd.f32 %v463, %v724
    %v726 = vpop.f32.mrf.mxu0
    %v727 = vadd.f32 %v465, %v726
    %728 = vmatprep.mubr.bf16.mxu0 0
    %729 = vmatmul.mubr.bf16.gmra.mxu0 %v614
    %v730 = vpop.f32.mrf.mxu0
    %v731 = vadd.f32 %v469, %v730
    %v732 = vpop.f32.mrf.mxu0
    %v733 = vadd.f32 %v471, %v732
    %v734 = vpop.f32.mrf.mxu0
    %v735 = vadd.f32 %v473, %v734
    %v736 = vpop.f32.mrf.mxu0
    %v737 = vadd.f32 %v475, %v736
    %738 = vmatprep.mubr.bf16.mxu0 0
    %739 = vmatmul.mubr.bf16.gmra.mxu0 %v617
    %v740 = vpop.f32.mrf.mxu0
    %v741 = vadd.f32 %v479, %v740
    %v742 = vpop.f32.mrf.mxu0
    %v743 = vadd.f32 %v481, %v742
    %v744 = vpop.f32.mrf.mxu0
    %v745 = vadd.f32 %v483, %v744
    %v746 = vpop.f32.mrf.mxu0
    %v747 = vadd.f32 %v485, %v746
    %748 = vmatprep.mubr.bf16.mxu0 0
    %749 = vmatmul.mubr.bf16.gmra.mxu0 %v620
    %v750 = vpop.f32.mrf.mxu0
    %v751 = vadd.f32 %v489, %v750
    %v752 = vpop.f32.mrf.mxu0
    %v753 = vadd.f32 %v491, %v752
    %v754 = vpop.f32.mrf.mxu0
    %v755 = vadd.f32 %v493, %v754
    %v756 = vpop.f32.mrf.mxu0
    %v757 = vadd.f32 %v495, %v756
    %758 = vmatprep.mubr.bf16.mxu0 0
    %759 = vmatmul.mubr.bf16.gmra.mxu0 %v623
    %v760 = vpop.f32.mrf.mxu0
    %v761 = vadd.f32 %v499, %v760
    %v762 = vpop.f32.mrf.mxu0
    %v763 = vadd.f32 %v501, %v762
    %v764 = vpop.f32.mrf.mxu0
    %v765 = vadd.f32 %v503, %v764
    %v766 = vpop.f32.mrf.mxu0
    %v767 = vadd.f32 %v505, %v766
    %768 = vmatprep.mubr.bf16.mxu0 0
    %769 = vmatmul.mubr.bf16.gmra.mxu0 %v626
    %v770 = vpop.f32.mrf.mxu0
    %v771 = vadd.f32 %v509, %v770
    %v772 = vpop.f32.mrf.mxu0
    %v773 = vadd.f32 %v511, %v772
    %v774 = vpop.f32.mrf.mxu0
    %v775 = vadd.f32 %v513, %v774
    %v776 = vpop.f32.mrf.mxu0
    %v777 = vadd.f32 %v515, %v776
    %778 = vmatprep.mubr.bf16.mxu0 0
    %779 = vmatmul.mubr.bf16.gmra.mxu0 %v629
    %v780 = vpop.f32.mrf.mxu0
    %v781 = vadd.f32 %v519, %v780
    %v782 = vpop.f32.mrf.mxu0
    %v783 = vadd.f32 %v521, %v782
    %v784 = vpop.f32.mrf.mxu0
    %v785 = vadd.f32 %v523, %v784
    %v786 = vpop.f32.mrf.mxu0
    %v787 = vadd.f32 %v525, %v786
    %788 = vmatprep.mubr.bf16.mxu0 0
    %789 = vmatmul.mubr.bf16.gmra.mxu0 %v632
    %v790 = vpop.f32.mrf.mxu0
    %v791 = vadd.f32 %v529, %v790
    %v792 = vpop.f32.mrf.mxu0
    %v793 = vadd.f32 %v531, %v792
    %v794 = vpop.f32.mrf.mxu0
    %v795 = vadd.f32 %v533, %v794
    %v796 = vpop.f32.mrf.mxu0
    %v797 = vadd.f32 %v535, %v796
    %798 = vmatprep.mubr.bf16.mxu0 0
    %799 = vmatmul.mubr.bf16.gmra.mxu0 %v635
    %v800 = vpop.f32.mrf.mxu0
    %v801 = vadd.f32 %v539, %v800
    %v802 = vpop.f32.mrf.mxu0
    %v803 = vadd.f32 %v541, %v802
    %v804 = vpop.f32.mrf.mxu0
    %v805 = vadd.f32 %v543, %v804
    %v806 = vpop.f32.mrf.mxu0
    %v807 = vadd.f32 %v545, %v806
    %808 = vmatprep.mubr.bf16.mxu0 0
    %809 = vmatmul.mubr.bf16.gmra.mxu0 %v638
    %v810 = vpop.f32.mrf.mxu0
    %v811 = vadd.f32 %v549, %v810
    %v812 = vpop.f32.mrf.mxu0
    %v813 = vadd.f32 %v551, %v812
    %v814 = vpop.f32.mrf.mxu0
    %v815 = vadd.f32 %v553, %v814
    %v816 = vpop.f32.mrf.mxu0
    %v817 = vadd.f32 %v555, %v816
    %818 = vmatprep.mubr.bf16.mxu0 0
    %819 = vmatmul.mubr.bf16.gmra.mxu0 %v641
    %v820 = vpop.f32.mrf.mxu0
    %v821 = vadd.f32 %v559, %v820
    %v822 = vpop.f32.mrf.mxu0
    %v823 = vadd.f32 %v561, %v822
    %v824 = vpop.f32.mrf.mxu0
    %v825 = vadd.f32 %v563, %v824
    %v826 = vpop.f32.mrf.mxu0
    %v827 = vadd.f32 %v565, %v826
    %828 = vmatprep.mubr.bf16.mxu0 0
    %829 = vmatmul.mubr.bf16.gmra.mxu0 %v644
    %v830 = vpop.f32.mrf.mxu0
    %v831 = vadd.f32 %v569, %v830
    %v832 = vpop.f32.mrf.mxu0
    %v833 = vadd.f32 %v571, %v832
    %v834 = vpop.f32.mrf.mxu0
    %v835 = vadd.f32 %v573, %v834
    %v836 = vpop.f32.mrf.mxu0
    %v837 = vadd.f32 %v575, %v836
    %838 = vdwg.mxu0
    %v839 = vld [vmem:[%s4] sm:$0x3]
    %v841 = vlaneseq
    %v842 = vshrl.u32 %v841, 7
    %v843 = vsub.s32 0, %v842
    %v844 = vrot.slane %v839, %v843
    %v845 = vlaneseq
    %v846 = vshrl.u32 %v845, 7
    %v847 = vsub.s32 1, %v846
    %v848 = vrot.slane %v839, %v847
    %v851 = vadd.f32 %v681, %v844
    %v852 = vadd.f32 %v683, %v848
    %v853 = vadd.f32 %v685, %v844
    %v854 = vadd.f32 %v687, %v848
    %v855 = vadd.f32 %v691, %v844
    %v856 = vadd.f32 %v693, %v848
    %v857 = vadd.f32 %v695, %v844
    %v858 = vadd.f32 %v697, %v848
    %v859 = vadd.f32 %v701, %v844
    %v860 = vadd.f32 %v703, %v848
    %v861 = vadd.f32 %v705, %v844
    %v862 = vadd.f32 %v707, %v848
    %v863 = vadd.f32 %v711, %v844
    %v864 = vadd.f32 %v713, %v848
    %v865 = vadd.f32 %v715, %v844
    %v866 = vadd.f32 %v717, %v848
    %v867 = vadd.f32 %v721, %v844
    %v868 = vadd.f32 %v723, %v848
    %v869 = vadd.f32 %v725, %v844
    %v870 = vadd.f32 %v727, %v848
    %v871 = vadd.f32 %v731, %v844
    %v872 = vadd.f32 %v733, %v848
    %v873 = vadd.f32 %v735, %v844
    %v874 = vadd.f32 %v737, %v848
    %v875 = vadd.f32 %v741, %v844
    %v876 = vadd.f32 %v743, %v848
    %v877 = vadd.f32 %v745, %v844
    %v878 = vadd.f32 %v747, %v848
    %v879 = vadd.f32 %v751, %v844
    %v880 = vadd.f32 %v753, %v848
    %v881 = vadd.f32 %v755, %v844
    %v882 = vadd.f32 %v757, %v848
    %v883 = vadd.f32 %v761, %v844
    %v884 = vadd.f32 %v763, %v848
    %v885 = vadd.f32 %v765, %v844
    %v886 = vadd.f32 %v767, %v848
    %v887 = vadd.f32 %v771, %v844
    %v888 = vadd.f32 %v773, %v848
    %v889 = vadd.f32 %v775, %v844
    %v890 = vadd.f32 %v777, %v848
    %v891 = vadd.f32 %v781, %v844
    %v892 = vadd.f32 %v783, %v848
    %v893 = vadd.f32 %v785, %v844
    %v894 = vadd.f32 %v787, %v848
    %v895 = vadd.f32 %v791, %v844
    %v896 = vadd.f32 %v793, %v848
    %v897 = vadd.f32 %v795, %v844
    %v898 = vadd.f32 %v797, %v848
    %v899 = vadd.f32 %v801, %v844
    %v900 = vadd.f32 %v803, %v848
    %v901 = vadd.f32 %v805, %v844
    %v902 = vadd.f32 %v807, %v848
    %v903 = vadd.f32 %v811, %v844
    %v904 = vadd.f32 %v813, %v848
    %v905 = vadd.f32 %v815, %v844
    %v906 = vadd.f32 %v817, %v848
    %v907 = vadd.f32 %v821, %v844
    %v908 = vadd.f32 %v823, %v848
    %v909 = vadd.f32 %v825, %v844
    %v910 = vadd.f32 %v827, %v848
    %v911 = vadd.f32 %v831, %v844
    %v912 = vadd.f32 %v833, %v848
    %v913 = vadd.f32 %v835, %v844
    %v914 = vadd.f32 %v837, %v848
    %v915 = vmax.f32 %v851, 0.0
    %v916 = vmax.f32 %v852, 0.0
    %v917 = vmax.f32 %v853, 0.0
    %v918 = vmax.f32 %v854, 0.0
    %v919 = vmax.f32 %v855, 0.0
    %v920 = vmax.f32 %v856, 0.0
    %v921 = vmax.f32 %v857, 0.0
    %v922 = vmax.f32 %v858, 0.0
    %v923 = vmax.f32 %v859, 0.0
    %v924 = vmax.f32 %v860, 0.0
    %v925 = vmax.f32 %v861, 0.0
    %v926 = vmax.f32 %v862, 0.0
    %v927 = vmax.f32 %v863, 0.0
    %v928 = vmax.f32 %v864, 0.0
    %v929 = vmax.f32 %v865, 0.0
    %v930 = vmax.f32 %v866, 0.0
    %v931 = vmax.f32 %v867, 0.0
    %v932 = vmax.f32 %v868, 0.0
    %v933 = vmax.f32 %v869, 0.0
    %v934 = vmax.f32 %v870, 0.0
    %v935 = vmax.f32 %v871, 0.0
    %v936 = vmax.f32 %v872, 0.0
    %v937 = vmax.f32 %v873, 0.0
    %v938 = vmax.f32 %v874, 0.0
    %v939 = vmax.f32 %v875, 0.0
    %v940 = vmax.f32 %v876, 0.0
    %v941 = vmax.f32 %v877, 0.0
    %v942 = vmax.f32 %v878, 0.0
    %v943 = vmax.f32 %v879, 0.0
    %v944 = vmax.f32 %v880, 0.0
    %v945 = vmax.f32 %v881, 0.0
    %v946 = vmax.f32 %v882, 0.0
    %v947 = vmax.f32 %v883, 0.0
    %v948 = vmax.f32 %v884, 0.0
    %v949 = vmax.f32 %v885, 0.0
    %v950 = vmax.f32 %v886, 0.0
    %v951 = vmax.f32 %v887, 0.0
    %v952 = vmax.f32 %v888, 0.0
    %v953 = vmax.f32 %v889, 0.0
    %v954 = vmax.f32 %v890, 0.0
    %v955 = vmax.f32 %v891, 0.0
    %v956 = vmax.f32 %v892, 0.0
    %v957 = vmax.f32 %v893, 0.0
    %v958 = vmax.f32 %v894, 0.0
    %v959 = vmax.f32 %v895, 0.0
    %v960 = vmax.f32 %v896, 0.0
    %v961 = vmax.f32 %v897, 0.0
    %v962 = vmax.f32 %v898, 0.0
    %v963 = vmax.f32 %v899, 0.0
    %v964 = vmax.f32 %v900, 0.0
    %v965 = vmax.f32 %v901, 0.0
    %v966 = vmax.f32 %v902, 0.0
    %v967 = vmax.f32 %v903, 0.0
    %v968 = vmax.f32 %v904, 0.0
    %v969 = vmax.f32 %v905, 0.0
    %v970 = vmax.f32 %v906, 0.0
    %v971 = vmax.f32 %v907, 0.0
    %v972 = vmax.f32 %v908, 0.0
    %v973 = vmax.f32 %v909, 0.0
    %v974 = vmax.f32 %v910, 0.0
    %v975 = vmax.f32 %v911, 0.0
    %v976 = vmax.f32 %v912, 0.0
    %v977 = vmax.f32 %v913, 0.0
    %v978 = vmax.f32 %v914, 0.0
    %v979 = vpack.c.bf16 %v917, %v915
    %v980 = vpack.c.bf16 %v918, %v916
    %v981 = vpack.c.bf16 %v921, %v919
    %v982 = vpack.c.bf16 %v922, %v920
    %v983 = vpack.c.bf16 %v925, %v923
    %v984 = vpack.c.bf16 %v926, %v924
    %v985 = vpack.c.bf16 %v929, %v927
    %v986 = vpack.c.bf16 %v930, %v928
    %v987 = vpack.c.bf16 %v933, %v931
    %v988 = vpack.c.bf16 %v934, %v932
    %v989 = vpack.c.bf16 %v937, %v935
    %v990 = vpack.c.bf16 %v938, %v936
    %v991 = vpack.c.bf16 %v941, %v939
    %v992 = vpack.c.bf16 %v942, %v940
    %v993 = vpack.c.bf16 %v945, %v943
    %v994 = vpack.c.bf16 %v946, %v944
    %v995 = vpack.c.bf16 %v949, %v947
    %v996 = vpack.c.bf16 %v950, %v948
    %v997 = vpack.c.bf16 %v953, %v951
    %v998 = vpack.c.bf16 %v954, %v952
    %v999 = vpack.c.bf16 %v957, %v955
    %v1000 = vpack.c.bf16 %v958, %v956
    %v1001 = vpack.c.bf16 %v961, %v959
    %v1002 = vpack.c.bf16 %v962, %v960
    %v1003 = vpack.c.bf16 %v965, %v963
    %v1004 = vpack.c.bf16 %v966, %v964
    %v1005 = vpack.c.bf16 %v969, %v967
    %v1006 = vpack.c.bf16 %v970, %v968
    %v1007 = vpack.c.bf16 %v973, %v971
    %v1008 = vpack.c.bf16 %v974, %v972
    %v1009 = vpack.c.bf16 %v977, %v975
    %v1010 = vpack.c.bf16 %v978, %v976
    %v1011 = vld [vmem:[%s5] sm:$0xf]
    %v1012 = vld [vmem:[%s5 + $0x4] sm:$0xf]
    %v1013 = vld [vmem:[%s5 + $0x8] sm:$0xf]
    %v1014 = vld [vmem:[%s5 + $0xc] sm:$0xf]
    %v1015 = vld [vmem:[%s5 + $0x10] sm:$0xf]
    %v1016 = vld [vmem:[%s5 + $0x14] sm:$0xf]
    %v1017 = vld [vmem:[%s5 + $0x18] sm:$0xf]
    %v1018 = vld [vmem:[%s5 + $0x1c] sm:$0xf]
    %v1019 = vld [vmem:[%s5 + $0x20] sm:$0xf]
    %v1020 = vld [vmem:[%s5 + $0x24] sm:$0xf]
    %v1021 = vld [vmem:[%s5 + $0x28] sm:$0xf]
    %v1022 = vld [vmem:[%s5 + $0x2c] sm:$0xf]
    %v1023 = vld [vmem:[%s5 + $0x30] sm:$0xf]
    %v1024 = vld [vmem:[%s5 + $0x34] sm:$0xf]
    %v1025 = vld [vmem:[%s5 + $0x38] sm:$0xf]
    %v1026 = vld [vmem:[%s5 + $0x3c] sm:$0xf]
    %v1027 = vld [vmem:[%s5 + $0x40] sm:$0xf]
    %v1028 = vld [vmem:[%s5 + $0x44] sm:$0xf]
    %v1029 = vld [vmem:[%s5 + $0x48] sm:$0xf]
    %v1030 = vld [vmem:[%s5 + $0x4c] sm:$0xf]
    %v1031 = vld [vmem:[%s5 + $0x50] sm:$0xf]
    %v1032 = vld [vmem:[%s5 + $0x54] sm:$0xf]
    %v1033 = vld [vmem:[%s5 + $0x58] sm:$0xf]
    %v1034 = vld [vmem:[%s5 + $0x5c] sm:$0xf]
    %v1035 = vld [vmem:[%s5 + $0x60] sm:$0xf]
    %v1036 = vld [vmem:[%s5 + $0x64] sm:$0xf]
    %v1037 = vld [vmem:[%s5 + $0x68] sm:$0xf]
    %v1038 = vld [vmem:[%s5 + $0x6c] sm:$0xf]
    %v1039 = vld [vmem:[%s5 + $0x70] sm:$0xf]
    %v1040 = vld [vmem:[%s5 + $0x74] sm:$0xf]
    %v1041 = vld [vmem:[%s5 + $0x78] sm:$0xf]
    %v1042 = vld [vmem:[%s5 + $0x7c] sm:$0xf]
    %v1043 = vld [vmem:[%s6] sm:$0x1]
    %v1045 = vlaneseq
    %v1046 = vshrl.u32 %v1045, 7
    %v1047 = vsub.s32 0, %v1046
    %v1048 = vrot.slane %v1043, %v1047
    %v1082 = vunpack.c.l.b16 %v1011
    %v1083 = vunpack.c.l.b16 %v1012
    %v1084 = vunpack.c.l.b16 %v1013
    %v1085 = vunpack.c.l.b16 %v1014
    %v1086 = vunpack.c.l.b16 %v1015
    %v1087 = vunpack.c.l.b16 %v1016
    %v1088 = vunpack.c.l.b16 %v1017
    %v1089 = vunpack.c.l.b16 %v1018
    %v1090 = vunpack.c.l.b16 %v1019
    %v1091 = vunpack.c.l.b16 %v1020
    %v1092 = vunpack.c.l.b16 %v1021
    %v1093 = vunpack.c.l.b16 %v1022
    %v1094 = vunpack.c.l.b16 %v1023
    %v1095 = vunpack.c.l.b16 %v1024
    %v1096 = vunpack.c.l.b16 %v1025
    %v1097 = vunpack.c.l.b16 %v1026
    %v1098 = vunpack.c.l.b16 %v1027
    %v1099 = vunpack.c.l.b16 %v1028
    %v1100 = vunpack.c.l.b16 %v1029
    %v1101 = vunpack.c.l.b16 %v1030
    %v1102 = vunpack.c.l.b16 %v1031
    %v1103 = vunpack.c.l.b16 %v1032
    %v1104 = vunpack.c.l.b16 %v1033
    %v1105 = vunpack.c.l.b16 %v1034
    %v1106 = vunpack.c.l.b16 %v1035
    %v1107 = vunpack.c.l.b16 %v1036
    %v1108 = vunpack.c.l.b16 %v1037
    %v1109 = vunpack.c.l.b16 %v1038
    %v1110 = vunpack.c.l.b16 %v1039
    %v1111 = vunpack.c.l.b16 %v1040
    %v1112 = vunpack.c.l.b16 %v1041
    %v1113 = vunpack.c.l.b16 %v1042
    %v1114 = vpack.c.b16 %v1083, %v1082
    %v1115 = vpack.c.b16 %v1085, %v1084
    %v1116 = vpack.c.b16 %v1087, %v1086
    %v1117 = vpack.c.b16 %v1089, %v1088
    %v1118 = vpack.c.b16 %v1091, %v1090
    %v1119 = vpack.c.b16 %v1093, %v1092
    %v1120 = vpack.c.b16 %v1095, %v1094
    %v1121 = vpack.c.b16 %v1097, %v1096
    %v1122 = vpack.c.b16 %v1099, %v1098
    %v1123 = vpack.c.b16 %v1101, %v1100
    %v1124 = vpack.c.b16 %v1103, %v1102
    %v1125 = vpack.c.b16 %v1105, %v1104
    %v1126 = vpack.c.b16 %v1107, %v1106
    %v1127 = vpack.c.b16 %v1109, %v1108
    %v1128 = vpack.c.b16 %v1111, %v1110
    %v1129 = vpack.c.b16 %v1113, %v1112
    %1146 = vmatprep.subr.bf16.mxu0 0
    %1147 = vmatpush1.bf16.msra.mxu0 %v1121
    %1148 = vmatprep.subr.bf16.mxu0 0
    %1149 = vmatpush1.bf16.msra.mxu0 %v1120
    %1150 = vmatprep.subr.bf16.mxu0 0
    %1151 = vmatpush1.bf16.msra.mxu0 %v1119
    %1152 = vmatprep.subr.bf16.mxu0 0
    %1153 = vmatpush1.bf16.msra.mxu0 %v1118
    %1154 = vmatprep.subr.bf16.mxu0 0
    %1155 = vmatpush1.bf16.msra.mxu0 %v1117
    %1156 = vmatprep.subr.bf16.mxu0 0
    %1157 = vmatpush1.bf16.msra.mxu0 %v1116
    %1158 = vmatprep.subr.bf16.mxu0 0
    %1159 = vmatpush1.bf16.msra.mxu0 %v1115
    %1160 = vmatprep.subr.bf16.mxu0 0
    %1161 = vmatpush1.bf16.msra.mxu0 %v1114
    %1162 = vmatprep.subr.bf16.mxu0 0
    %1163 = vmatpush2.bf16.msra.mxu0 %v1129
    %1164 = vmatprep.subr.bf16.mxu0 0
    %1165 = vmatpush2.bf16.msra.mxu0 %v1128
    %1166 = vmatprep.subr.bf16.mxu0 0
    %1167 = vmatpush2.bf16.msra.mxu0 %v1127
    %1168 = vmatprep.subr.bf16.mxu0 0
    %1169 = vmatpush2.bf16.msra.mxu0 %v1126
    %1170 = vmatprep.subr.bf16.mxu0 0
    %1171 = vmatpush2.bf16.msra.mxu0 %v1125
    %1172 = vmatprep.subr.bf16.mxu0 0
    %1173 = vmatpush2.bf16.msra.mxu0 %v1124
    %1174 = vmatprep.subr.bf16.mxu0 0
    %1175 = vmatpush2.bf16.msra.mxu0 %v1123
    %1176 = vmatprep.subr.bf16.mxu0 0
    %1177 = vmatpush2.bf16.msra.mxu0 %v1122
    %1178 = vmatprep.mubr.bf16.mxu0 %v980
    %1179 = vmatmul.mubr.bf16.gmra.mxu0 %v979
    %v1180 = vpop.f32.mrf.mxu0
    %v1181 = vadd.f32 %v1048, %v1180
    %v1182 = vpop.f32.mrf.mxu0
    %v1183 = vpop.f32.mrf.mxu0
    %v1184 = vadd.f32 %v1048, %v1183
    %v1185 = vpop.f32.mrf.mxu0
    %1186 = vmatprep.mubr.bf16.mxu0 %v982
    %1187 = vmatmul.mubr.bf16.gmra.mxu0 %v981
    %v1188 = vpop.f32.mrf.mxu0
    %v1189 = vadd.f32 %v1048, %v1188
    %v1190 = vpop.f32.mrf.mxu0
    %v1191 = vpop.f32.mrf.mxu0
    %v1192 = vadd.f32 %v1048, %v1191
    %v1193 = vpop.f32.mrf.mxu0
    %1194 = vmatprep.mubr.bf16.mxu0 %v984
    %1195 = vmatmul.mubr.bf16.gmra.mxu0 %v983
    %v1196 = vpop.f32.mrf.mxu0
    %v1197 = vadd.f32 %v1048, %v1196
    %v1198 = vpop.f32.mrf.mxu0
    %v1199 = vpop.f32.mrf.mxu0
    %v1200 = vadd.f32 %v1048, %v1199
    %v1201 = vpop.f32.mrf.mxu0
    %1202 = vmatprep.mubr.bf16.mxu0 %v986
    %1203 = vmatmul.mubr.bf16.gmra.mxu0 %v985
    %v1204 = vpop.f32.mrf.mxu0
    %v1205 = vadd.f32 %v1048, %v1204
    %v1206 = vpop.f32.mrf.mxu0
    %v1207 = vpop.f32.mrf.mxu0
    %v1208 = vadd.f32 %v1048, %v1207
    %v1209 = vpop.f32.mrf.mxu0
    %1210 = vmatprep.mubr.bf16.mxu0 %v988
    %1211 = vmatmul.mubr.bf16.gmra.mxu0 %v987
    %v1212 = vpop.f32.mrf.mxu0
    %v1213 = vadd.f32 %v1048, %v1212
    %v1214 = vpop.f32.mrf.mxu0
    %v1215 = vpop.f32.mrf.mxu0
    %v1216 = vadd.f32 %v1048, %v1215
    %v1217 = vpop.f32.mrf.mxu0
    %1218 = vmatprep.mubr.bf16.mxu0 %v990
    %1219 = vmatmul.mubr.bf16.gmra.mxu0 %v989
    %v1220 = vpop.f32.mrf.mxu0
    %v1221 = vadd.f32 %v1048, %v1220
    %v1222 = vpop.f32.mrf.mxu0
    %v1223 = vpop.f32.mrf.mxu0
    %v1224 = vadd.f32 %v1048, %v1223
    %v1225 = vpop.f32.mrf.mxu0
    %1226 = vmatprep.mubr.bf16.mxu0 %v992
    %1227 = vmatmul.mubr.bf16.gmra.mxu0 %v991
    %v1228 = vpop.f32.mrf.mxu0
    %v1229 = vadd.f32 %v1048, %v1228
    %v1230 = vpop.f32.mrf.mxu0
    %v1231 = vpop.f32.mrf.mxu0
    %v1232 = vadd.f32 %v1048, %v1231
    %v1233 = vpop.f32.mrf.mxu0
    %1234 = vmatprep.mubr.bf16.mxu0 %v994
    %1235 = vmatmul.mubr.bf16.gmra.mxu0 %v993
    %v1236 = vpop.f32.mrf.mxu0
    %v1237 = vadd.f32 %v1048, %v1236
    %v1238 = vpop.f32.mrf.mxu0
    %v1239 = vpop.f32.mrf.mxu0
    %v1240 = vadd.f32 %v1048, %v1239
    %v1241 = vpop.f32.mrf.mxu0
    %1242 = vmatprep.mubr.bf16.mxu0 %v996
    %1243 = vmatmul.mubr.bf16.gmra.mxu0 %v995
    %v1244 = vpop.f32.mrf.mxu0
    %v1245 = vadd.f32 %v1048, %v1244
    %v1246 = vpop.f32.mrf.mxu0
    %v1247 = vpop.f32.mrf.mxu0
    %v1248 = vadd.f32 %v1048, %v1247
    %v1249 = vpop.f32.mrf.mxu0
    %1250 = vmatprep.mubr.bf16.mxu0 %v998
    %1251 = vmatmul.mubr.bf16.gmra.mxu0 %v997
    %v1252 = vpop.f32.mrf.mxu0
    %v1253 = vadd.f32 %v1048, %v1252
    %v1254 = vpop.f32.mrf.mxu0
    %v1255 = vpop.f32.mrf.mxu0
    %v1256 = vadd.f32 %v1048, %v1255
    %v1257 = vpop.f32.mrf.mxu0
    %1258 = vmatprep.mubr.bf16.mxu0 %v1000
    %1259 = vmatmul.mubr.bf16.gmra.mxu0 %v999
    %v1260 = vpop.f32.mrf.mxu0
    %v1261 = vadd.f32 %v1048, %v1260
    %v1262 = vpop.f32.mrf.mxu0
    %v1263 = vpop.f32.mrf.mxu0
    %v1264 = vadd.f32 %v1048, %v1263
    %v1265 = vpop.f32.mrf.mxu0
    %1266 = vmatprep.mubr.bf16.mxu0 %v1002
    %1267 = vmatmul.mubr.bf16.gmra.mxu0 %v1001
    %v1268 = vpop.f32.mrf.mxu0
    %v1269 = vadd.f32 %v1048, %v1268
    %v1270 = vpop.f32.mrf.mxu0
    %v1271 = vpop.f32.mrf.mxu0
    %v1272 = vadd.f32 %v1048, %v1271
    %v1273 = vpop.f32.mrf.mxu0
    %1274 = vmatprep.mubr.bf16.mxu0 %v1004
    %1275 = vmatmul.mubr.bf16.gmra.mxu0 %v1003
    %v1276 = vpop.f32.mrf.mxu0
    %v1277 = vadd.f32 %v1048, %v1276
    %v1278 = vpop.f32.mrf.mxu0
    %v1279 = vpop.f32.mrf.mxu0
    %v1280 = vadd.f32 %v1048, %v1279
    %v1281 = vpop.f32.mrf.mxu0
    %1282 = vmatprep.mubr.bf16.mxu0 %v1006
    %1283 = vmatmul.mubr.bf16.gmra.mxu0 %v1005
    %v1284 = vpop.f32.mrf.mxu0
    %v1285 = vadd.f32 %v1048, %v1284
    %v1286 = vpop.f32.mrf.mxu0
    %v1287 = vpop.f32.mrf.mxu0
    %v1288 = vadd.f32 %v1048, %v1287
    %v1289 = vpop.f32.mrf.mxu0
    %1290 = vmatprep.mubr.bf16.mxu0 %v1008
    %1291 = vmatmul.mubr.bf16.gmra.mxu0 %v1007
    %v1292 = vpop.f32.mrf.mxu0
    %v1293 = vadd.f32 %v1048, %v1292
    %v1294 = vpop.f32.mrf.mxu0
    %v1295 = vpop.f32.mrf.mxu0
    %v1296 = vadd.f32 %v1048, %v1295
    %v1297 = vpop.f32.mrf.mxu0
    %1298 = vmatprep.mubr.bf16.mxu0 %v1010
    %1299 = vmatmul.mubr.bf16.gmra.mxu0 %v1009
    %v1300 = vpop.f32.mrf.mxu0
    %v1301 = vadd.f32 %v1048, %v1300
    %v1302 = vpop.f32.mrf.mxu0
    %v1303 = vpop.f32.mrf.mxu0
    %v1304 = vadd.f32 %v1048, %v1303
    %v1305 = vpop.f32.mrf.mxu0
    %1306 = vdwg.mxu0
    %1307 = vst [vmem:[#allocation2] sm:$0xff] %v1181
    %1308 = vst [vmem:[#allocation2 + $0x8] sm:$0xff] %v1184
    %1309 = vst [vmem:[#allocation2 + $0x10] sm:$0xff] %v1189
    %1310 = vst [vmem:[#allocation2 + $0x18] sm:$0xff] %v1192
    %1311 = vst [vmem:[#allocation2 + $0x20] sm:$0xff] %v1197
    %1312 = vst [vmem:[#allocation2 + $0x28] sm:$0xff] %v1200
    %1313 = vst [vmem:[#allocation2 + $0x30] sm:$0xff] %v1205
    %1314 = vst [vmem:[#allocation2 + $0x38] sm:$0xff] %v1208
    %1315 = vst [vmem:[#allocation2 + $0x40] sm:$0xff] %v1213
    %1316 = vst [vmem:[#allocation2 + $0x48] sm:$0xff] %v1216
    %1317 = vst [vmem:[#allocation2 + $0x50] sm:$0xff] %v1221
    %1318 = vst [vmem:[#allocation2 + $0x58] sm:$0xff] %v1224
    %1319 = vst [vmem:[#allocation2 + $0x60] sm:$0xff] %v1229
    %1320 = vst [vmem:[#allocation2 + $0x68] sm:$0xff] %v1232
    %1321 = vst [vmem:[#allocation2 + $0x70] sm:$0xff] %v1237
    %1322 = vst [vmem:[#allocation2 + $0x78] sm:$0xff] %v1240
    %1323 = vst [vmem:[#allocation2 + $0x80] sm:$0xff] %v1245
    %1324 = vst [vmem:[#allocation2 + $0x88] sm:$0xff] %v1248
    %1325 = vst [vmem:[#allocation2 + $0x90] sm:$0xff] %v1253
    %1326 = vst [vmem:[#allocation2 + $0x98] sm:$0xff] %v1256
    %1327 = vst [vmem:[#allocation2 + $0xa0] sm:$0xff] %v1261
    %1328 = vst [vmem:[#allocation2 + $0xa8] sm:$0xff] %v1264
    %1329 = vst [vmem:[#allocation2 + $0xb0] sm:$0xff] %v1269
    %1330 = vst [vmem:[#allocation2 + $0xb8] sm:$0xff] %v1272
    %1331 = vst [vmem:[#allocation2 + $0xc0] sm:$0xff] %v1277
    %1332 = vst [vmem:[#allocation2 + $0xc8] sm:$0xff] %v1280
    %1333 = vst [vmem:[#allocation2 + $0xd0] sm:$0xff] %v1285
    %1334 = vst [vmem:[#allocation2 + $0xd8] sm:$0xff] %v1288
    %1335 = vst [vmem:[#allocation2 + $0xe0] sm:$0xff] %v1293
    %1336 = vst [vmem:[#allocation2 + $0xe8] sm:$0xff] %v1296
    %1337 = vst [vmem:[#allocation2 + $0xf0] sm:$0xff] %v1301
    %1338 = vst [vmem:[#allocation2 + $0xf8] sm:$0xff] %v1304
    // Predicated region
    $region30: #{tpu_custom_call.1} parent=1 // pred_check
      _
    $region31: #{tpu_custom_call.1} parent=1 // pred_check_branch
      %1340 = sbr.rel (0) target = $region33
    $region32: #{tpu_custom_call.1} parent=1 // pred_region
      %s1342 = ssub.s32 4096, 4096
      %1343 = vsyncadd [#allocation3], %s1342
      %s1344 = sshll.u32 [#allocation2], 4
      %s1345 = int_to_ptr.vmem [resolvable:$true] %s1344
      %1350 = dma.vmem_to_hbm [thread:$0]  %s1345, 4096, %s7, [#allocation3], 128, 128, 8
    $region33: #{tpu_custom_call.1} parent=1 // pred_fallthru
      _
    // Predicated region
    $region34: #{tpu_custom_call.1} parent=1 // pred_check
      _
    $region35: #{tpu_custom_call.1} parent=1 // pred_check_branch
      %1352 = sbr.rel (0) target = $region37
    $region36: #{tpu_custom_call.1} parent=1 // pred_region
      %1353 = dma.done [#allocation3], 4096
    $region37: #{tpu_custom_call.1} parent=1 // pred_fallthru
      _
    %1354 = vsyncpa [#allocation3], 1

</llo_original>
